<compile_context>
chip_gen: v5e
topology: v5e:2x2
jax: 0.10.0
libtpu: 0.0.40
codegen_flags: <defaults>
</compile_context>

<pallas_src>
import jax
import jax.numpy as jnp
from jax.experimental import pallas as pl
from jax.experimental.pallas import tpu as pltpu


# Total per-step VMEM target: safe under v7x's 64 MiB/TC, ample headroom on
# v5e/v6e (128 MiB physical).
_VMEM_TARGET_BYTES = 24 << 20
# Ceiling for the resident Toeplitz operand (2*HW x HW, f32).
_TOEPLITZ_LIMIT_BYTES = 16 << 20


def spatial_attention_kernel(x_ref, a_ref, o_ref):
    """One grid step: `nb` batch rows, all channels, full H*W lane axis."""
    x = x_ref[...]                                        # (nb, C, HW), I/O dtype
    # Channel pooling: max is exact in the I/O dtype; mean uses f32 accumulation
    # only (the 1/C scale is folded into A_avg wrapper-side).
    x_max = jnp.max(x, axis=1).astype(jnp.float32)        # (nb, HW)
    x_sum = jnp.sum(x, axis=1, dtype=jnp.float32)         # (nb, HW)
    pooled = jnp.concatenate([x_max, x_sum], axis=-1)     # (nb, 2*HW), lane-aligned
    # Single MXU matmul replaces the 7x7 "same" conv over [max, avg].
    conv = jnp.dot(pooled, a_ref[...], preferred_element_type=jnp.float32)
    attn = jax.nn.sigmoid(conv).astype(o_ref.dtype)       # cast only the (nb, HW) map
    o_ref[...] = x * attn[:, None, :]                     # native-dtype multiply


def _conv_to_toeplitz(weight, H, W, C):
    """Fold the k x k 'same' conv (2 in-ch -> 1 out-ch, no bias) plus the 1/C
    channel-mean scale into one dense (2*H*W, H*W) matrix so the in-kernel conv
    is a single MXU matmul on concat([chan_max, chan_sum])."""
    w = jnp.asarray(weight, jnp.float32)[0]               # (2, k, k)
    k = w.shape[-1]
    p = k // 2
    dh = jnp.arange(H)[:, None] - jnp.arange(H)[None, :] + p      # (H_src, H_dst)
    dw = jnp.arange(W)[:, None] - jnp.arange(W)[None, :] + p      # (W_src, W_dst)
    valid = (((dh >= 0) & (dh < k))[:, None, :, None]
             & ((dw >= 0) & (dw < k))[None, :, None, :])          # (H, W, H, W)
    dh_c = jnp.clip(dh, 0, k - 1)
    dw_c = jnp.clip(dw, 0, k - 1)

    def one(c):
        taps = w[c][dh_c[:, None, :, None], dw_c[None, :, None, :]]   # (H, W, H, W)
        return jnp.where(valid, taps, 0.0).reshape(H * W, H * W)

    a_max = one(0)
    a_avg = one(1) * (1.0 / C)        # fold the channel-mean scale into the weights
    # TODO(synk): optionally cast A (and the pooled rows) to bf16 to halve the
    # resident footprint on v7x / large HW; kept f32 here for accuracy.
    return jnp.concatenate([a_max, a_avg], axis=0)        # (2*HW, HW)


def _pick_batch_block(N, C, HW, itemsize, a_resident_bytes):
    """Batch rows per grid step, sized against a realistic VMEM budget."""
    row_pack = 32 // itemsize                 # sublane rows per packed tile (8/16/32)
    c_pad = -(-C // row_pack) * row_pack      # (C, HW) tiles pad C up to the pack
    # Per batch element: input + output streams, each double-buffered by the
    # BlockSpec pipeline, at the padded-C footprint, plus small f32 temps
    # (max/sum/pooled/conv rows).
    per_elem = 2 * 2 * c_pad * HW * itemsize + 6 * HW * 4
    budget = max(_VMEM_TARGET_BYTES - a_resident_bytes, per_elem)
    nb = int(max(1, min(N, budget // per_elem)))
    # Keep >= 2 grid steps when possible so v7x can use both TensorCores.
    if N >= 2:
        nb = min(nb, pl.cdiv(N, 2))
    return nb


def spatial_attention(x, conv_weight):
    N, C, H, W = x.shape
    HW = H * W

    a = _conv_to_toeplitz(conv_weight, H, W, C)           # (2*HW, HW) f32
    a_bytes = 2 * HW * HW * 4
    if a_bytes > _TOEPLITZ_LIMIT_BYTES:
        # TODO(synk): for large H*W, replace the resident Toeplitz operand with a
        # tap-unrolled conv on the pooled rows (49x pltpu.roll + VPU FMA) or tile
        # the (HW, HW) matmul over the output spatial dim.
        raise NotImplementedError("H*W too large for the resident-Toeplitz path")

    x_flat = x.reshape(N, C, HW)                          # lane-dense I/O layout
    # Budget with 2*a_bytes so the double-buffered fallback for A still fits.
    nb = _pick_batch_block(N, C, HW, x.dtype.itemsize, 2 * a_bytes)

    # Pad N to a multiple of nb (instead of shrinking nb for awkward N); the
    # padded zero rows are computed but sliced off below.
    n_pad = pl.cdiv(N, nb) * nb
    if n_pad != N:
        x_flat = jnp.pad(x_flat, ((0, n_pad - N), (0, 0), (0, 0)))

    row_pack = 32 // x.dtype.itemsize
    c_pad = -(-C // row_pack) * row_pack
    block_bytes = 2 * 2 * nb * c_pad * HW * x.dtype.itemsize
    vmem_limit = int(min(60 << 20,
                         max(32 << 20, 2 * a_bytes + block_bytes + (6 << 20))))

    io_spec = pl.BlockSpec((nb, C, HW), lambda n: (n, 0, 0))

    def call(a_spec):
        return pl.pallas_call(
            spatial_attention_kernel,
            out_shape=jax.ShapeDtypeStruct((n_pad, C, HW), x.dtype),
            grid_spec=pltpu.PrefetchScalarGridSpec(
                num_scalar_prefetch=0,
                grid=(n_pad // nb,),
                in_specs=[io_spec, a_spec],
                out_specs=io_spec,
            ),
            compiler_params=pltpu.CompilerParams(
                dimension_semantics=("parallel",),
                vmem_limit_bytes=vmem_limit),
        )(x_flat, a)

    try:
        # A never changes across grid steps -> request a single resident VMEM
        # buffer instead of the default double buffer.
        out_flat = call(pl.BlockSpec((2 * HW, HW), lambda n: (0, 0),
                                     pipeline_mode=pl.Buffered(1)))
    except Exception:
        # Fallback for Pallas versions that reject single-buffering; costs one
        # extra (2*HW, HW) f32 buffer (already covered by the budget above).
        out_flat = call(pl.BlockSpec((2 * HW, HW), lambda n: (0, 0)))

    return out_flat[:N].reshape(N, C, H, W)


def spatial_attention_ref(x, conv_weight):
    """Pure-JAX reference mirroring the PyTorch forward."""
    x_max = jnp.max(x, axis=1, keepdims=True)
    x_avg = jnp.mean(x, axis=1, keepdims=True)
    s = jnp.concatenate([x_max, x_avg], axis=1)           # (N, 2, H, W)
    k = conv_weight.shape[-1]
    p = k // 2
    conv = jax.lax.conv_general_dilated(
        s, jnp.asarray(conv_weight, s.dtype),
        window_strides=(1, 1), padding=[(p, p), (p, p)],
        dimension_numbers=("NCHW", "OIHW", "NCHW"),
        precision=jax.lax.Precision.HIGHEST)              # (N, 1, H, W)
    return x * jax.nn.sigmoid(conv)


if __name__ == "__main__":
    key = jax.random.PRNGKey(0)
    kx, kw = jax.random.split(key)

    N, C, H, W = 2, 4, 16, 16
    x = jax.random.normal(kx, (N, C, H, W), jnp.float32)
    conv_weight = jax.random.normal(kw, (1, 2, 7, 7), jnp.float32) * 0.1

    out = jax.block_until_ready(spatial_attention(x, conv_weight))

    ref = spatial_attention_ref(x, conv_weight)
    assert out.shape == (N, C, H, W)
    assert jnp.allclose(out, ref, atol=1e-4, rtol=1e-4), "mismatch vs reference"
    print("KERNEL_OK")
</pallas_src>

<mosaic_0001>
module attributes {stable_mosaic.version = 11 : i64} {
  func.func @spatial_attention_kernel(%arg0: i32, %arg1: memref<1x4x256xf32, #tpu.memory_space<vmem>>, %arg2: memref<512x256xf32, #tpu.memory_space<vmem>>, %arg3: memref<1x4x256xf32, #tpu.memory_space<vmem>>) attributes {dimension_semantics = [#tpu.dimension_semantics<parallel>], iteration_bounds = array<i64: 2>, scalar_prefetch = 0 : i64, scratch_operands = 0 : i64, tpu.core_type = #tpu.core_type<tc>, window_params = [{transform_indices = @transform_0, window_bounds = array<i64: 1, 4, 256>}, {pipeline_mode = #tpu.pipeline_mode<synchronous>, transform_indices = @transform_1, window_bounds = array<i64: 512, 256>}, {transform_indices = @transform_2, window_bounds = array<i64: 1, 4, 256>}]} {
    %c0 = arith.constant 0 : index
    %c0_0 = arith.constant 0 : index
    %c0_1 = arith.constant 0 : index
    %0 = vector.load %arg1[%c0, %c0_0, %c0_1] : memref<1x4x256xf32, #tpu.memory_space<vmem>>, vector<1x4x256xf32>
    %cst = arith.constant dense<0xFF800000> : vector<1x256xf32>
    %1 = vector.multi_reduction <maximumf>, %0, %cst [1] : vector<1x4x256xf32> to vector<1x256xf32>
    %cst_2 = arith.constant dense<0.000000e+00> : vector<1x256xf32>
    %2 = vector.multi_reduction <add>, %0, %cst_2 [1] : vector<1x4x256xf32> to vector<1x256xf32>
    %3 = tpu.concatenate %1, %2 in 1 : vector<1x256xf32>, vector<1x256xf32> -> vector<1x512xf32>
    %c0_3 = arith.constant 0 : index
    %c0_4 = arith.constant 0 : index
    %4 = vector.load %arg2[%c0_3, %c0_4] : memref<512x256xf32, #tpu.memory_space<vmem>>, vector<512x256xf32>
    %cst_5 = arith.constant dense<0.000000e+00> : vector<1x256xf32>
    %5 = tpu.matmul %3, %4, %cst_5 {dimension_numbers = #tpu.dot_dimension_numbers<[1], [0], [0], [1], [0, 0, 1, 1], [], []>} : vector<1x512xf32>, vector<512x256xf32>, vector<1x256xf32> -> vector<1x256xf32>
    %6 = arith.negf %5 : vector<1x256xf32>
    %7 = math.exp %6 : vector<1x256xf32>
    %cst_6 = arith.constant 1.000000e+00 : f32
    %8 = vector.broadcast %cst_6 : f32 to vector<1x256xf32>
    %9 = arith.addf %8, %7 : vector<1x256xf32>
    %10 = arith.divf %8, %9 : vector<1x256xf32>
    %11 = vector.shape_cast %10 : vector<1x256xf32> to vector<1x1x256xf32>
    %12 = vector.broadcast %11 : vector<1x1x256xf32> to vector<1x4x256xf32>
    %13 = arith.mulf %0, %12 : vector<1x4x256xf32>
    %c0_7 = arith.constant 0 : index
    %c0_8 = arith.constant 0 : index
    %c0_9 = arith.constant 0 : index
    %14 = vector.load %arg3[%c0_7, %c0_8, %c0_9] : memref<1x4x256xf32, #tpu.memory_space<vmem>>, vector<1x4x256xf32>
    tpu.vector_store %arg3[%c0_7, %c0_8, %c0_9], %13 {strides = array<i32>} : memref<1x4x256xf32, #tpu.memory_space<vmem>>, vector<1x4x256xf32>,
    return
  }
  func.func @transform_0(%arg0: i32) -> (i32, i32, i32) {
    %c0_i32 = arith.constant 0 : i32
    %c0_i32_0 = arith.constant 0 : i32
    %c0_i32_1 = arith.constant 0 : i32
    return %arg0, %c0_i32, %c0_i32_0 : i32, i32, i32
  }
  func.func @transform_1(%arg0: i32) -> (i32, i32) {
    %c0_i32 = arith.constant 0 : i32
    %c0_i32_0 = arith.constant 0 : i32
    %c0_i32_1 = arith.constant 0 : i32
    return %c0_i32, %c0_i32_0 : i32, i32
  }
  func.func @transform_2(%arg0: i32) -> (i32, i32, i32) {
    %c0_i32 = arith.constant 0 : i32
    %c0_i32_0 = arith.constant 0 : i32
    %c0_i32_1 = arith.constant 0 : i32
    return %arg0, %c0_i32, %c0_i32_0 : i32, i32, i32
  }
}

module attributes {stable_mosaic.version = 11 : i64} {
  func.func @spatial_attention_kernel(%arg0: i32, %arg1: memref<1x4x256xf32, #tpu.memory_space<vmem>>, %arg2: memref<512x256xf32, #tpu.memory_space<vmem>>, %arg3: memref<1x4x256xf32, #tpu.memory_space<vmem>>) attributes {dimension_semantics = [#tpu.dimension_semantics<parallel>], iteration_bounds = array<i64: 2>, scalar_prefetch = 0 : i64, scratch_operands = 0 : i64, tpu.core_type = #tpu.core_type<tc>, window_params = [{transform_indices = @transform_0, window_bounds = array<i64: 1, 4, 256>}, {pipeline_mode = #tpu.pipeline_mode<synchronous>, transform_indices = @transform_1, window_bounds = array<i64: 512, 256>}, {transform_indices = @transform_2, window_bounds = array<i64: 1, 4, 256>}]} {
    %c0 = arith.constant 0 : index
    %c0_0 = arith.constant 0 : index
    %c0_1 = arith.constant 0 : index
    %0 = vector.load %arg1[%c0, %c0_0, %c0_1] : memref<1x4x256xf32, #tpu.memory_space<vmem>>, vector<1x4x256xf32>
    %cst = arith.constant dense<0xFF800000> : vector<1x256xf32>
    %1 = vector.multi_reduction <maximumf>, %0, %cst [1] : vector<1x4x256xf32> to vector<1x256xf32>
    %cst_2 = arith.constant dense<0.000000e+00> : vector<1x256xf32>
    %2 = vector.multi_reduction <add>, %0, %cst_2 [1] : vector<1x4x256xf32> to vector<1x256xf32>
    %3 = tpu.concatenate %1, %2 in 1 : vector<1x256xf32>, vector<1x256xf32> -> vector<1x512xf32>
    %c0_3 = arith.constant 0 : index
    %c0_4 = arith.constant 0 : index
    %4 = vector.load %arg2[%c0_3, %c0_4] : memref<512x256xf32, #tpu.memory_space<vmem>>, vector<512x256xf32>
    %cst_5 = arith.constant dense<0.000000e+00> : vector<1x256xf32>
    %5 = tpu.matmul %3, %4, %cst_5 {dimension_numbers = #tpu.dot_dimension_numbers<[1], [0], [0], [1], [0, 0, 1, 1], [], []>} : vector<1x512xf32>, vector<512x256xf32>, vector<1x256xf32> -> vector<1x256xf32>
    %6 = arith.negf %5 : vector<1x256xf32>
    %7 = math.exp %6 : vector<1x256xf32>
    %cst_6 = arith.constant 1.000000e+00 : f32
    %8 = vector.broadcast %cst_6 : f32 to vector<1x256xf32>
    %9 = arith.addf %8, %7 : vector<1x256xf32>
    %10 = arith.divf %8, %9 : vector<1x256xf32>
    %11 = vector.shape_cast %10 : vector<1x256xf32> to vector<1x1x256xf32>
    %12 = vector.broadcast %11 : vector<1x1x256xf32> to vector<1x4x256xf32>
    %13 = arith.mulf %0, %12 : vector<1x4x256xf32>
    %c0_7 = arith.constant 0 : index
    %c0_8 = arith.constant 0 : index
    %c0_9 = arith.constant 0 : index
    %14 = vector.load %arg3[%c0_7, %c0_8, %c0_9] : memref<1x4x256xf32, #tpu.memory_space<vmem>>, vector<1x4x256xf32>
    tpu.vector_store %arg3[%c0_7, %c0_8, %c0_9], %13 {strides = array<i32>} : memref<1x4x256xf32, #tpu.memory_space<vmem>>, vector<1x4x256xf32>,
    return
  }
  func.func @transform_0(%arg0: i32) -> (i32, i32, i32) {
    %c0_i32 = arith.constant 0 : i32
    %c0_i32_0 = arith.constant 0 : i32
    %c0_i32_1 = arith.constant 0 : i32
    return %arg0, %c0_i32, %c0_i32_0 : i32, i32, i32
  }
  func.func @transform_1(%arg0: i32) -> (i32, i32) {
    %c0_i32 = arith.constant 0 : i32
    %c0_i32_0 = arith.constant 0 : i32
    %c0_i32_1 = arith.constant 0 : i32
    return %c0_i32, %c0_i32_0 : i32, i32
  }
  func.func @transform_2(%arg0: i32) -> (i32, i32, i32) {
    %c0_i32 = arith.constant 0 : i32
    %c0_i32_0 = arith.constant 0 : i32
    %c0_i32_1 = arith.constant 0 : i32
    return %arg0, %c0_i32, %c0_i32_0 : i32, i32, i32
  }
}

</mosaic_0001>

<llo_original>
// kernel: tpu_custom_call.1
$region0: #{tpu_custom_call.1}
  #allocation0 [shape = 'u32[]', space=smem, size = 0x4, offset = 0x4, fixed_abs, tag = 'smem constant byte address 0x4 - core index']
  #allocation1 [shape = 'u32[72,128]{1,0:T(1,128)}', space=vmem, size = 0x9000, scoped, tag = 'internal scratch']
  %s0 = inlined_call_operand.hbm [shape: f32[2,4,256], index: 0, kind: input, shape index: {}]
  %s1 = inlined_call_operand.hbm [shape: f32[512,256], index: 1, kind: input, shape index: {}]
  %s2 = inlined_call_operand.hbm [shape: f32[2,4,256], index: 2, kind: output, shape index: {}]
  %s3 = sld [smem:[#allocation0]]
  $region49: #{tpu_custom_call.1} parent=0
    _
  %s5 = ssub.s32 1, %s3
  %s6 = scalar_select 0, %s5, %s3
  $region1: #{tpu_custom_call.1} parent=0
    #allocation2 [shape = 'u8[8192]{0}', space=vmem, size = 0x2000, scoped, tag = 'input window, operand 0']
    #allocation3 [shape = 's32[2]{0}', space=sflag, size = 0x8, scoped, tag = 'scoped memory for tpu_custom_call.1']
    #allocation4 [shape = 's32[2]{0}', space=sflag, size = 0x8, scoped, tag = 'scoped memory for tpu_custom_call.1']
    #allocation5 [shape = 'u8[524288]{0}', space=vmem, size = 0x80000, scoped, tag = 'input window, operand 1, single buffered']
    #allocation6 [shape = 's32[1]{0}', space=sflag, size = 0x4, scoped, tag = 'scoped memory for tpu_custom_call.1']
    #allocation7 [shape = 'u8[8192]{0}', space=vmem, size = 0x2000, scoped, tag = 'output window, operand 0']
    %7 = vsyncpa [#allocation3], 0
    %s8 = scalar_lea.sflag [#allocation3], 1
    %9 = vsyncpa %s8, 0
    %10 = vsyncpa [#allocation6], 0
    %11 = vsyncpa [#allocation4], 0
    %s12 = scalar_lea.sflag [#allocation4], 1
    %13 = vsyncpa %s12, 0
    loop: start=0, step=1, limit=4
    $region2: #{tpu_custom_call.1} parent=1 // loop_pre_header
      _
    $region3: #{tpu_custom_call.1} parent=1 // loop_header
      %s15 = sphi 0, %s19
      %p16 = scmp.ge.s32.totalorder %s15, 4
      %s25 = sphi 0, %s27
      %s28 = sphi 0, %s25
      %s29 = sphi 0, %s28
      %s45 = sphi 0, %s29
      %s49 = sphi 0, %s49
      %s51 = sphi 0, %s49
      %s52 = sphi 0, %s51
      %s66 = sphi 0, %s52
      %s72 = sphi 0, %s74
      %s75 = sphi 0, %s72
      %s76 = sphi 0, %s75
      %s92 = sphi 0, %s76
    $region4: #{tpu_custom_call.1} parent=1 // loop_header_branch
      %18 = sbr.rel (%p16) target = $region8
    $region5: #{tpu_custom_call.1} parent=1 // loop_body
      %s20 = ssub.s32 %s15, 1
      %s21 = ssub.s32 %s15, 2
      %s22 = sadd.s32 %s15, 1
      %s23 = ssub.s32 %s15, %s22
      %p24 = scmp.eq.s32.totalorder %s23, 0
      %s26 = sadd.s32 %s25, 1
      %s27 = scalar_select %p24, %s25, %s26
      %p30 = pneg %p24
      %p31 = scmp.eq.s32.totalorder %s15, 1
      %p32 = por %p30, %p31
      %p33 = scmp.ne.s32.totalorder %s25, %s28
      %p34 = scmp.eq.s32.totalorder %s15, 0
      %p35 = por %p33, %p34
      %p36 = scmp.ne.s32.totalorder %s25, %s28
      %p37 = scmp.eq.s32.totalorder %s20, 1
      %p38 = por %p36, %p37
      %p39 = scmp.ne.s32.totalorder %s28, %s29
      %p40 = scmp.eq.s32.totalorder %s20, 0
      %p41 = por %p39, %p40
      %p42 = scmp.ne.s32.totalorder %s28, %s29
      %p43 = scmp.eq.s32.totalorder %s21, 1
      %p44 = por %p42, %p43
      %p46 = scmp.ne.s32.totalorder %s29, %s45
      %p47 = scmp.eq.s32.totalorder %s21, 0
      %p48 = por %p46, %p47
      %s50 = sadd.s32 %s49, 1
      %p53 = scmp.eq.s32.totalorder %s15, 1
      %p54 = scmp.ne.s32.totalorder %s49, %s51
      %p55 = scmp.eq.s32.totalorder %s15, 0
      %p56 = por %p54, %p55
      %p57 = scmp.ne.s32.totalorder %s49, %s51
      %p58 = scmp.eq.s32.totalorder %s20, 1
      %p59 = por %p57, %p58
      %p60 = scmp.ne.s32.totalorder %s51, %s52
      %p61 = scmp.eq.s32.totalorder %s20, 0
      %p62 = por %p60, %p61
      %p63 = scmp.ne.s32.totalorder %s51, %s52
      %p64 = scmp.eq.s32.totalorder %s21, 1
      %p65 = por %p63, %p64
      %p67 = scmp.ne.s32.totalorder %s52, %s66
      %p68 = scmp.eq.s32.totalorder %s21, 0
      %p69 = por %p67, %p68
      %s70 = ssub.s32 %s15, %s22
      %p71 = scmp.eq.s32.totalorder %s70, 0
      %s73 = sadd.s32 %s72, 1
      %s74 = scalar_select %p71, %s72, %s73
      %p77 = pneg %p71
      %p78 = scmp.eq.s32.totalorder %s15, 1
      %p79 = por %p77, %p78
      %p80 = scmp.ne.s32.totalorder %s72, %s75
      %p81 = scmp.eq.s32.totalorder %s15, 0
      %p82 = por %p80, %p81
      %p83 = scmp.ne.s32.totalorder %s72, %s75
      %p84 = scmp.eq.s32.totalorder %s20, 1
      %p85 = por %p83, %p84
      %p86 = scmp.ne.s32.totalorder %s75, %s76
      %p87 = scmp.eq.s32.totalorder %s20, 0
      %p88 = por %p86, %p87
      %p89 = scmp.ne.s32.totalorder %s75, %s76
      %p90 = scmp.eq.s32.totalorder %s21, 1
      %p91 = por %p89, %p90
      %p93 = scmp.ne.s32.totalorder %s76, %s92
      %p94 = scmp.eq.s32.totalorder %s21, 0
      %p95 = por %p93, %p94
      %p96 = scmp.le.s32.totalorder 1, %s15
      %p97 = scmp.lt.s32.totalorder %s15, 3
      %p98 = pnand %p96, %p97
      %p99 = pneg %p98
      // Predicated region
      $region9: #{tpu_custom_call.1} parent=5 // pred_check
        _
      $region10: #{tpu_custom_call.1} parent=5 // pred_check_branch
        %101 = sbr.rel (%p98) target = $region12
      $region11: #{tpu_custom_call.1} parent=5 // pred_region
        %s102 = ssub.s32 %s15, 1
        // Predicated region
        $region13: #{tpu_custom_call.1} parent=11 // pred_check
          %p103 = pneg %p62
        $region14: #{tpu_custom_call.1} parent=11 // pred_check_branch
          %105 = sbr.rel (%p103) target = $region16
        $region15: #{tpu_custom_call.1} parent=11 // pred_region
          %107 = vsyncadd [#allocation6], 0
          %s108 = sshll.u32 %s1, 4
          %s109 = int_to_ptr.hbm [resolvable:$true] %s108
          %s110 = sshll.u32 [#allocation5], 4
          %s111 = int_to_ptr.vmem [resolvable:$true] %s110
          %116 = dma.hbm_to_vmem [thread:$0]  %s109, 16384, %s111, [#allocation6], 256, 256, 16
        $region16: #{tpu_custom_call.1} parent=11 // pred_fallthru
          _
      $region12: #{tpu_custom_call.1} parent=5 // pred_fallthru
        _
      %p117 = scmp.lt.s32.totalorder %s15, 2
      // Predicated region
      $region17: #{tpu_custom_call.1} parent=5 // pred_check
        %p118 = pneg %p117
      $region18: #{tpu_custom_call.1} parent=5 // pred_check_branch
        %120 = sbr.rel (%p118) target = $region20
      $region19: #{tpu_custom_call.1} parent=5 // pred_region
        // Predicated region
        $region21: #{tpu_custom_call.1} parent=19 // pred_check
          %p121 = pneg %p35
        $region22: #{tpu_custom_call.1} parent=19 // pred_check_branch
          %123 = sbr.rel (%p121) target = $region24
        $region23: #{tpu_custom_call.1} parent=19 // pred_region
          %s124 = sand.u32 %s25, 1
          %s125 = scalar_lea.sflag [#allocation3], %s124
          %s126 = sand.u32 %s25, 1
          %s127 = smul.addr %s126, 8
          %s128 = scalar_lea.vmem [#allocation2], %s127
          %130 = vsyncadd %s125, 0
          %s131 = smul.addr %s15, 2
          %s132 = smul.addr %s131, 4
          %s133 = scalar_lea.hbm %s0, %s132
          %s135 = sshll.u32 %s133, 4
          %s136 = int_to_ptr.hbm [resolvable:$true] %s135
          %s137 = sshll.u32 %s128, 4
          %s138 = int_to_ptr.vmem [resolvable:$true] %s137
          %140 = dma.hbm_to_vmem [thread:$0]  %s136, 128, %s138, %s125
        $region24: #{tpu_custom_call.1} parent=19 // pred_fallthru
          _
      $region20: #{tpu_custom_call.1} parent=5 // pred_fallthru
        _
      %p141 = scmp.le.s32.totalorder 1, %s15
      %p142 = scmp.lt.s32.totalorder %s15, 3
      %p143 = pnand %p141, %p142
      %p144 = pneg %p143
      // Predicated region
      $region25: #{tpu_custom_call.1} parent=5 // pred_check
        _
      $region26: #{tpu_custom_call.1} parent=5 // pred_check_branch
        %146 = sbr.rel (%p143) target = $region28
      $region27: #{tpu_custom_call.1} parent=5 // pred_region
        %s147 = ssub.s32 %s15, 1
        %s148 = sand.u32 %s28, 1
        %s149 = scalar_lea.sflag [#allocation3], %s148
        %s150 = sand.u32 %s28, 1
        %s151 = smul.addr %s150, 8
        %s152 = scalar_lea.vmem [#allocation2], %s151
        // Predicated region
        $region29: #{tpu_custom_call.1} parent=27 // pred_check
          %p153 = pneg %p41
        $region30: #{tpu_custom_call.1} parent=27 // pred_check_branch
          %155 = sbr.rel (%p153) target = $region32
        $region31: #{tpu_custom_call.1} parent=27 // pred_region
          %157 = dma.done %s149, 128
        $region32: #{tpu_custom_call.1} parent=27 // pred_fallthru
          _
        // Predicated region
        $region33: #{tpu_custom_call.1} parent=27 // pred_check
          %p158 = pneg %p62
        $region34: #{tpu_custom_call.1} parent=27 // pred_check_branch
          %160 = sbr.rel (%p158) target = $region36
        $region35: #{tpu_custom_call.1} parent=27 // pred_region
          %162 = dma.done [#allocation6], 16384
        $region36: #{tpu_custom_call.1} parent=27 // pred_fallthru
          _
        %s163 = sand.u32 %s28, 1
        %s164 = scalar_lea.sflag [#allocation3], %s163
        %s165 = sand.u32 %s28, 1
        %s166 = smul.addr %s165, 8
        %s167 = scalar_lea.vmem [#allocation2], %s166
        %p168 = pneg %p41
        %p169 = pneg %p38
        %p170 = pneg %p62
        %p171 = pneg %p59
        %p172 = pneg %p88
        %p173 = pneg %p85
        %s174 = sand.u32 %s75, 1
        %s175 = scalar_lea.sflag [#allocation4], %s174
        %s176 = sand.u32 %s75, 1
        %s177 = smul.addr %s176, 8
        %s178 = scalar_lea.vmem [#allocation7], %s177
        %v179 = vld [vmem:[%s152] sm:$0xff]
        %181 = vst [vmem:[#allocation1] ss:$2 sm:$0xff] %v179
        %v182 = vld.sshfl [vmem:[#allocation1] sm:$0xff pattern:$0x75316420]
        %v183 = vld.sshfl [vmem:[#allocation1 + $0x8] sm:$0xff pattern:$0x75316420]
        %vm186 = vcmask 1043456
        %v187 = vsel %vm186, %v182, -inf
        %v188 = vrot.slane %v187, 4
        %v189 = vmax.f32 %v187, %v188
        %v190 = vrot.slane %v189, 2
        %v191 = vmax.f32 %v189, %v190
        %v192 = vrot.slane %v191, 1
        %v193 = vmax.f32 %v191, %v192
        %v194 = vsel %vm186, %v183, -inf
        %v195 = vrot.slane %v194, 4
        %v196 = vmax.f32 %v194, %v195
        %v197 = vrot.slane %v196, 2
        %v198 = vmax.f32 %v196, %v197
        %v199 = vrot.slane %v198, 1
        %v200 = vmax.f32 %v198, %v199
        %201 = vst [vmem:[#allocation1] ss:$2 sm:$0xff] %v179
        %v202 = vld.sshfl [vmem:[#allocation1] sm:$0xff pattern:$0x75316420]
        %v203 = vld.sshfl [vmem:[#allocation1 + $0x8] sm:$0xff pattern:$0x75316420]
        %v206 = vsel %vm186, %v202, 0.0
        %v207 = vrot.slane %v206, 4
        %v208 = vadd.f32 %v206, %v207
        %v209 = vrot.slane %v208, 2
        %v210 = vadd.f32 %v208, %v209
        %v211 = vrot.slane %v210, 1
        %v212 = vadd.f32 %v210, %v211
        %v213 = vsel %vm186, %v203, 0.0
        %v214 = vrot.slane %v213, 4
        %v215 = vadd.f32 %v213, %v214
        %v216 = vrot.slane %v215, 2
        %v217 = vadd.f32 %v215, %v216
        %v218 = vrot.slane %v217, 1
        %v219 = vadd.f32 %v217, %v218
        %v220 = vld [vmem:[#allocation5] sm:$0xff]
        %v221 = vld [vmem:[#allocation5 + $0x8] sm:$0xff]
        %v222 = vld [vmem:[#allocation5 + $0x10] sm:$0xff]
        %v223 = vld [vmem:[#allocation5 + $0x18] sm:$0xff]
        %v224 = vld [vmem:[#allocation5 + $0x20] sm:$0xff]
        %v225 = vld [vmem:[#allocation5 + $0x28] sm:$0xff]
        %v226 = vld [vmem:[#allocation5 + $0x30] sm:$0xff]
        %v227 = vld [vmem:[#allocation5 + $0x38] sm:$0xff]
        %v228 = vld [vmem:[#allocation5 + $0x40] sm:$0xff]
        %v229 = vld [vmem:[#allocation5 + $0x48] sm:$0xff]
        %v230 = vld [vmem:[#allocation5 + $0x50] sm:$0xff]
        %v231 = vld [vmem:[#allocation5 + $0x58] sm:$0xff]
        %v232 = vld [vmem:[#allocation5 + $0x60] sm:$0xff]
        %v233 = vld [vmem:[#allocation5 + $0x68] sm:$0xff]
        %v234 = vld [vmem:[#allocation5 + $0x70] sm:$0xff]
        %v235 = vld [vmem:[#allocation5 + $0x78] sm:$0xff]
        %v236 = vld [vmem:[#allocation5 + $0x80] sm:$0xff]
        %v237 = vld [vmem:[#allocation5 + $0x88] sm:$0xff]
        %v238 = vld [vmem:[#allocation5 + $0x90] sm:$0xff]
        %v239 = vld [vmem:[#allocation5 + $0x98] sm:$0xff]
        %v240 = vld [vmem:[#allocation5 + $0xa0] sm:$0xff]
        %v241 = vld [vmem:[#allocation5 + $0xa8] sm:$0xff]
        %v242 = vld [vmem:[#allocation5 + $0xb0] sm:$0xff]
        %v243 = vld [vmem:[#allocation5 + $0xb8] sm:$0xff]
        %v244 = vld [vmem:[#allocation5 + $0xc0] sm:$0xff]
        %v245 = vld [vmem:[#allocation5 + $0xc8] sm:$0xff]
        %v246 = vld [vmem:[#allocation5 + $0xd0] sm:$0xff]
        %v247 = vld [vmem:[#allocation5 + $0xd8] sm:$0xff]
        %v248 = vld [vmem:[#allocation5 + $0xe0] sm:$0xff]
        %v249 = vld [vmem:[#allocation5 + $0xe8] sm:$0xff]
        %v250 = vld [vmem:[#allocation5 + $0xf0] sm:$0xff]
        %v251 = vld [vmem:[#allocation5 + $0xf8] sm:$0xff]
        %v252 = vld [vmem:[#allocation5 + $0x100] sm:$0xff]
        %v253 = vld [vmem:[#allocation5 + $0x108] sm:$0xff]
        %v254 = vld [vmem:[#allocation5 + $0x110] sm:$0xff]
        %v255 = vld [vmem:[#allocation5 + $0x118] sm:$0xff]
        %v256 = vld [vmem:[#allocation5 + $0x120] sm:$0xff]
        %v257 = vld [vmem:[#allocation5 + $0x128] sm:$0xff]
        %v258 = vld [vmem:[#allocation5 + $0x130] sm:$0xff]
        %v259 = vld [vmem:[#allocation5 + $0x138] sm:$0xff]
        %v260 = vld [vmem:[#allocation5 + $0x140] sm:$0xff]
        %v261 = vld [vmem:[#allocation5 + $0x148] sm:$0xff]
        %v262 = vld [vmem:[#allocation5 + $0x150] sm:$0xff]
        %v263 = vld [vmem:[#allocation5 + $0x158] sm:$0xff]
        %v264 = vld [vmem:[#allocation5 + $0x160] sm:$0xff]
        %v265 = vld [vmem:[#allocation5 + $0x168] sm:$0xff]
        %v266 = vld [vmem:[#allocation5 + $0x170] sm:$0xff]
        %v267 = vld [vmem:[#allocation5 + $0x178] sm:$0xff]
        %v268 = vld [vmem:[#allocation5 + $0x180] sm:$0xff]
        %v269 = vld [vmem:[#allocation5 + $0x188] sm:$0xff]
        %v270 = vld [vmem:[#allocation5 + $0x190] sm:$0xff]
        %v271 = vld [vmem:[#allocation5 + $0x198] sm:$0xff]
        %v272 = vld [vmem:[#allocation5 + $0x1a0] sm:$0xff]
        %v273 = vld [vmem:[#allocation5 + $0x1a8] sm:$0xff]
        %v274 = vld [vmem:[#allocation5 + $0x1b0] sm:$0xff]
        %v275 = vld [vmem:[#allocation5 + $0x1b8] sm:$0xff]
        %v276 = vld [vmem:[#allocation5 + $0x1c0] sm:$0xff]
        %v277 = vld [vmem:[#allocation5 + $0x1c8] sm:$0xff]
        %v278 = vld [vmem:[#allocation5 + $0x1d0] sm:$0xff]
        %v279 = vld [vmem:[#allocation5 + $0x1d8] sm:$0xff]
        %v280 = vld [vmem:[#allocation5 + $0x1e0] sm:$0xff]
        %v281 = vld [vmem:[#allocation5 + $0x1e8] sm:$0xff]
        %v282 = vld [vmem:[#allocation5 + $0x1f0] sm:$0xff]
        %v283 = vld [vmem:[#allocation5 + $0x1f8] sm:$0xff]
        %v284 = vld [vmem:[#allocation5 + $0x200] sm:$0xff]
        %v285 = vld [vmem:[#allocation5 + $0x208] sm:$0xff]
        %v286 = vld [vmem:[#allocation5 + $0x210] sm:$0xff]
        %v287 = vld [vmem:[#allocation5 + $0x218] sm:$0xff]
        %v288 = vld [vmem:[#allocation5 + $0x220] sm:$0xff]
        %v289 = vld [vmem:[#allocation5 + $0x228] sm:$0xff]
        %v290 = vld [vmem:[#allocation5 + $0x230] sm:$0xff]
        %v291 = vld [vmem:[#allocation5 + $0x238] sm:$0xff]
        %v292 = vld [vmem:[#allocation5 + $0x240] sm:$0xff]
        %v293 = vld [vmem:[#allocation5 + $0x248] sm:$0xff]
        %v294 = vld [vmem:[#allocation5 + $0x250] sm:$0xff]
        %v295 = vld [vmem:[#allocation5 + $0x258] sm:$0xff]
        %v296 = vld [vmem:[#allocation5 + $0x260] sm:$0xff]
        %v297 = vld [vmem:[#allocation5 + $0x268] sm:$0xff]
        %v298 = vld [vmem:[#allocation5 + $0x270] sm:$0xff]
        %v299 = vld [vmem:[#allocation5 + $0x278] sm:$0xff]
        %v300 = vld [vmem:[#allocation5 + $0x280] sm:$0xff]
        %v301 = vld [vmem:[#allocation5 + $0x288] sm:$0xff]
        %v302 = vld [vmem:[#allocation5 + $0x290] sm:$0xff]
        %v303 = vld [vmem:[#allocation5 + $0x298] sm:$0xff]
        %v304 = vld [vmem:[#allocation5 + $0x2a0] sm:$0xff]
        %v305 = vld [vmem:[#allocation5 + $0x2a8] sm:$0xff]
        %v306 = vld [vmem:[#allocation5 + $0x2b0] sm:$0xff]
        %v307 = vld [vmem:[#allocation5 + $0x2b8] sm:$0xff]
        %v308 = vld [vmem:[#allocation5 + $0x2c0] sm:$0xff]
        %v309 = vld [vmem:[#allocation5 + $0x2c8] sm:$0xff]
        %v310 = vld [vmem:[#allocation5 + $0x2d0] sm:$0xff]
        %v311 = vld [vmem:[#allocation5 + $0x2d8] sm:$0xff]
        %v312 = vld [vmem:[#allocation5 + $0x2e0] sm:$0xff]
        %v313 = vld [vmem:[#allocation5 + $0x2e8] sm:$0xff]
        %v314 = vld [vmem:[#allocation5 + $0x2f0] sm:$0xff]
        %v315 = vld [vmem:[#allocation5 + $0x2f8] sm:$0xff]
        %v316 = vld [vmem:[#allocation5 + $0x300] sm:$0xff]
        %v317 = vld [vmem:[#allocation5 + $0x308] sm:$0xff]
        %v318 = vld [vmem:[#allocation5 + $0x310] sm:$0xff]
        %v319 = vld [vmem:[#allocation5 + $0x318] sm:$0xff]
        %v320 = vld [vmem:[#allocation5 + $0x320] sm:$0xff]
        %v321 = vld [vmem:[#allocation5 + $0x328] sm:$0xff]
        %v322 = vld [vmem:[#allocation5 + $0x330] sm:$0xff]
        %v323 = vld [vmem:[#allocation5 + $0x338] sm:$0xff]
        %v324 = vld [vmem:[#allocation5 + $0x340] sm:$0xff]
        %v325 = vld [vmem:[#allocation5 + $0x348] sm:$0xff]
        %v326 = vld [vmem:[#allocation5 + $0x350] sm:$0xff]
        %v327 = vld [vmem:[#allocation5 + $0x358] sm:$0xff]
        %v328 = vld [vmem:[#allocation5 + $0x360] sm:$0xff]
        %v329 = vld [vmem:[#allocation5 + $0x368] sm:$0xff]
        %v330 = vld [vmem:[#allocation5 + $0x370] sm:$0xff]
        %v331 = vld [vmem:[#allocation5 + $0x378] sm:$0xff]
        %v332 = vld [vmem:[#allocation5 + $0x380] sm:$0xff]
        %v333 = vld [vmem:[#allocation5 + $0x388] sm:$0xff]
        %v334 = vld [vmem:[#allocation5 + $0x390] sm:$0xff]
        %v335 = vld [vmem:[#allocation5 + $0x398] sm:$0xff]
        %v336 = vld [vmem:[#allocation5 + $0x3a0] sm:$0xff]
        %v337 = vld [vmem:[#allocation5 + $0x3a8] sm:$0xff]
        %v338 = vld [vmem:[#allocation5 + $0x3b0] sm:$0xff]
        %v339 = vld [vmem:[#allocation5 + $0x3b8] sm:$0xff]
        %v340 = vld [vmem:[#allocation5 + $0x3c0] sm:$0xff]
        %v341 = vld [vmem:[#allocation5 + $0x3c8] sm:$0xff]
        %v342 = vld [vmem:[#allocation5 + $0x3d0] sm:$0xff]
        %v343 = vld [vmem:[#allocation5 + $0x3d8] sm:$0xff]
        %v344 = vld [vmem:[#allocation5 + $0x3e0] sm:$0xff]
        %v345 = vld [vmem:[#allocation5 + $0x3e8] sm:$0xff]
        %v346 = vld [vmem:[#allocation5 + $0x3f0] sm:$0xff]
        %v347 = vld [vmem:[#allocation5 + $0x3f8] sm:$0xff]
        %348 = vmatpush.msra.mxu0 %v250
        %349 = vmatpush.msra.mxu0 %v248
        %350 = vmatpush.msra.mxu0 %v246
        %351 = vmatpush.msra.mxu0 %v244
        %352 = vmatpush.msra.mxu0 %v242
        %353 = vmatpush.msra.mxu0 %v240
        %354 = vmatpush.msra.mxu0 %v238
        %355 = vmatpush.msra.mxu0 %v236
        %356 = vmatpush.msra.mxu0 %v234
        %357 = vmatpush.msra.mxu0 %v232
        %358 = vmatpush.msra.mxu0 %v230
        %359 = vmatpush.msra.mxu0 %v228
        %360 = vmatpush.msra.mxu0 %v226
        %361 = vmatpush.msra.mxu0 %v224
        %362 = vmatpush.msra.mxu0 %v222
        %363 = vmatpush.msra.mxu0 %v220
        %364 = vmatmul.f32.gmra.mxu0 %v193
        %v365 = vpop.f32.mrf.mxu0
        %v366 = vadd.f32 0.0, %v365
        %367 = vdwg.mxu0
        %368 = vmatpush.msra.mxu0 %v282
        %369 = vmatpush.msra.mxu0 %v280
        %370 = vmatpush.msra.mxu0 %v278
        %371 = vmatpush.msra.mxu0 %v276
        %372 = vmatpush.msra.mxu0 %v274
        %373 = vmatpush.msra.mxu0 %v272
        %374 = vmatpush.msra.mxu0 %v270
        %375 = vmatpush.msra.mxu0 %v268
        %376 = vmatpush.msra.mxu0 %v266
        %377 = vmatpush.msra.mxu0 %v264
        %378 = vmatpush.msra.mxu0 %v262
        %379 = vmatpush.msra.mxu0 %v260
        %380 = vmatpush.msra.mxu0 %v258
        %381 = vmatpush.msra.mxu0 %v256
        %382 = vmatpush.msra.mxu0 %v254
        %383 = vmatpush.msra.mxu0 %v252
        %384 = vmatmul.f32.gmra.mxu0 %v200
        %v385 = vpop.f32.mrf.mxu0
        %v386 = vadd.f32 %v366, %v385
        %387 = vdwg.mxu0
        %388 = vmatpush.msra.mxu0 %v314
        %389 = vmatpush.msra.mxu0 %v312
        %390 = vmatpush.msra.mxu0 %v310
        %391 = vmatpush.msra.mxu0 %v308
        %392 = vmatpush.msra.mxu0 %v306
        %393 = vmatpush.msra.mxu0 %v304
        %394 = vmatpush.msra.mxu0 %v302
        %395 = vmatpush.msra.mxu0 %v300
        %396 = vmatpush.msra.mxu0 %v298
        %397 = vmatpush.msra.mxu0 %v296
        %398 = vmatpush.msra.mxu0 %v294
        %399 = vmatpush.msra.mxu0 %v292
        %400 = vmatpush.msra.mxu0 %v290
        %401 = vmatpush.msra.mxu0 %v288
        %402 = vmatpush.msra.mxu0 %v286
        %403 = vmatpush.msra.mxu0 %v284
        %404 = vmatmul.f32.gmra.mxu0 %v212
        %v405 = vpop.f32.mrf.mxu0
        %v406 = vadd.f32 %v386, %v405
        %407 = vdwg.mxu0
        %408 = vmatpush.msra.mxu0 %v346
        %409 = vmatpush.msra.mxu0 %v344
        %410 = vmatpush.msra.mxu0 %v342
        %411 = vmatpush.msra.mxu0 %v340
        %412 = vmatpush.msra.mxu0 %v338
        %413 = vmatpush.msra.mxu0 %v336
        %414 = vmatpush.msra.mxu0 %v334
        %415 = vmatpush.msra.mxu0 %v332
        %416 = vmatpush.msra.mxu0 %v330
        %417 = vmatpush.msra.mxu0 %v328
        %418 = vmatpush.msra.mxu0 %v326
        %419 = vmatpush.msra.mxu0 %v324
        %420 = vmatpush.msra.mxu0 %v322
        %421 = vmatpush.msra.mxu0 %v320
        %422 = vmatpush.msra.mxu0 %v318
        %423 = vmatpush.msra.mxu0 %v316
        %424 = vmatmul.f32.gmra.mxu0 %v219
        %v425 = vpop.f32.mrf.mxu0
        %v426 = vadd.f32 %v406, %v425
        %427 = vdwg.mxu0
        %428 = vmatpush.msra.mxu0 %v251
        %429 = vmatpush.msra.mxu0 %v249
        %430 = vmatpush.msra.mxu0 %v247
        %431 = vmatpush.msra.mxu0 %v245
        %432 = vmatpush.msra.mxu0 %v243
        %433 = vmatpush.msra.mxu0 %v241
        %434 = vmatpush.msra.mxu0 %v239
        %435 = vmatpush.msra.mxu0 %v237
        %436 = vmatpush.msra.mxu0 %v235
        %437 = vmatpush.msra.mxu0 %v233
        %438 = vmatpush.msra.mxu0 %v231
        %439 = vmatpush.msra.mxu0 %v229
        %440 = vmatpush.msra.mxu0 %v227
        %441 = vmatpush.msra.mxu0 %v225
        %442 = vmatpush.msra.mxu0 %v223
        %443 = vmatpush.msra.mxu0 %v221
        %444 = vmatmul.f32.gmra.mxu0 %v193
        %v445 = vpop.f32.mrf.mxu0
        %v446 = vadd.f32 0.0, %v445
        %447 = vdwg.mxu0
        %448 = vmatpush.msra.mxu0 %v283
        %449 = vmatpush.msra.mxu0 %v281
        %450 = vmatpush.msra.mxu0 %v279
        %451 = vmatpush.msra.mxu0 %v277
        %452 = vmatpush.msra.mxu0 %v275
        %453 = vmatpush.msra.mxu0 %v273
        %454 = vmatpush.msra.mxu0 %v271
        %455 = vmatpush.msra.mxu0 %v269
        %456 = vmatpush.msra.mxu0 %v267
        %457 = vmatpush.msra.mxu0 %v265
        %458 = vmatpush.msra.mxu0 %v263
        %459 = vmatpush.msra.mxu0 %v261
        %460 = vmatpush.msra.mxu0 %v259
        %461 = vmatpush.msra.mxu0 %v257
        %462 = vmatpush.msra.mxu0 %v255
        %463 = vmatpush.msra.mxu0 %v253
        %464 = vmatmul.f32.gmra.mxu0 %v200
        %v465 = vpop.f32.mrf.mxu0
        %v466 = vadd.f32 %v446, %v465
        %467 = vdwg.mxu0
        %468 = vmatpush.msra.mxu0 %v315
        %469 = vmatpush.msra.mxu0 %v313
        %470 = vmatpush.msra.mxu0 %v311
        %471 = vmatpush.msra.mxu0 %v309
        %472 = vmatpush.msra.mxu0 %v307
        %473 = vmatpush.msra.mxu0 %v305
        %474 = vmatpush.msra.mxu0 %v303
        %475 = vmatpush.msra.mxu0 %v301
        %476 = vmatpush.msra.mxu0 %v299
        %477 = vmatpush.msra.mxu0 %v297
        %478 = vmatpush.msra.mxu0 %v295
        %479 = vmatpush.msra.mxu0 %v293
        %480 = vmatpush.msra.mxu0 %v291
        %481 = vmatpush.msra.mxu0 %v289
        %482 = vmatpush.msra.mxu0 %v287
        %483 = vmatpush.msra.mxu0 %v285
        %484 = vmatmul.f32.gmra.mxu0 %v212
        %v485 = vpop.f32.mrf.mxu0
        %v486 = vadd.f32 %v466, %v485
        %487 = vdwg.mxu0
        %488 = vmatpush.msra.mxu0 %v347
        %489 = vmatpush.msra.mxu0 %v345
        %490 = vmatpush.msra.mxu0 %v343
        %491 = vmatpush.msra.mxu0 %v341
        %492 = vmatpush.msra.mxu0 %v339
        %493 = vmatpush.msra.mxu0 %v337
        %494 = vmatpush.msra.mxu0 %v335
        %495 = vmatpush.msra.mxu0 %v333
        %496 = vmatpush.msra.mxu0 %v331
        %497 = vmatpush.msra.mxu0 %v329
        %498 = vmatpush.msra.mxu0 %v327
        %499 = vmatpush.msra.mxu0 %v325
        %500 = vmatpush.msra.mxu0 %v323
        %501 = vmatpush.msra.mxu0 %v321
        %502 = vmatpush.msra.mxu0 %v319
        %503 = vmatpush.msra.mxu0 %v317
        %504 = vmatmul.f32.gmra.mxu0 %v219
        %v505 = vpop.f32.mrf.mxu0
        %v506 = vadd.f32 %v486, %v505
        %507 = vdwg.mxu0
        %v508 = vxor.u32 %v426, 2147483648
        %v509 = vxor.u32 %v506, 2147483648
        %v510 = vmul.f32 %v508, 1.442695
        %v511 = vpow.pop %v510
        %v512 = vmul.f32 %v509, 1.442695
        %v513 = vpow.pop %v512
        %v514 = vadd.f32 %v511, 1.0
        %v515 = vadd.f32 %v513, 1.0
        %v516 = vrcp.pop %v514
        %v517 = vmul.f32 %v514, %v516
        %v518 = vsub.f32 1.0, %v517
        %v519 = vmul.f32 %v516, %v518
        %v520 = vadd.f32 %v516, %v519
        %vm521 = vweird.f32 %v514
        %vm522 = vweird.f32 %v516
        %vm523 = vmor %vm521, %vm522
        %v524 = vsel %vm523, %v516, %v520
        %v525 = vand.u32 2147483647, %v514
        %vm526 = vcmp.eq.f32.partialorder %v525, 8.507059e+37
        %v527 = vand.u32 %v514, 2147483648
        %v528 = vor.u32 1.1754944e-38, %v527
        %v529 = vsel %vm526, %v528, %v524
        %v530 = vmul.f32 1.0, %v529
        %v531 = vrcp.pop %v515
        %v532 = vmul.f32 %v515, %v531
        %v533 = vsub.f32 1.0, %v532
        %v534 = vmul.f32 %v531, %v533
        %v535 = vadd.f32 %v531, %v534
        %vm536 = vweird.f32 %v515
        %vm537 = vweird.f32 %v531
        %vm538 = vmor %vm536, %vm537
        %v539 = vsel %vm538, %v531, %v535
        %v540 = vand.u32 2147483647, %v515
        %vm541 = vcmp.eq.f32.partialorder %v540, 8.507059e+37
        %v542 = vand.u32 %v515, 2147483648
        %v543 = vor.u32 1.1754944e-38, %v542
        %v544 = vsel %vm541, %v543, %v539
        %v545 = vmul.f32 1.0, %v544
        %v546 = vperm.slane %v530, 0
        %v547 = vperm.slane %v545, 0
        %v550 = vrot.slane %v547, 4
        %v551 = vsel %vm186, %v546, %v550
        %v553 = vmul.f32 %v179, %v551
        %554 = vst [vmem:[%s178] sm:$0xff] %v553
        %s555 = sand.u32 %s75, 1
        %s556 = scalar_lea.sflag [#allocation4], %s555
        %s557 = sand.u32 %s75, 1
        %s558 = smul.addr %s557, 8
        %s559 = scalar_lea.vmem [#allocation7], %s558
        // Predicated region
        $region37: #{tpu_custom_call.1} parent=27 // pred_check
          %p560 = pneg %p85
        $region38: #{tpu_custom_call.1} parent=27 // pred_check_branch
          %562 = sbr.rel (%p560) target = $region40
        $region39: #{tpu_custom_call.1} parent=27 // pred_region
          %564 = vsyncadd %s556, 0
          %s565 = smul.addr %s20, 2
          %s566 = smul.addr %s565, 4
          %s567 = scalar_lea.hbm %s2, %s566
          %s569 = sshll.u32 %s559, 4
          %s570 = int_to_ptr.vmem [resolvable:$true] %s569
          %s571 = sshll.u32 %s567, 4
          %s572 = int_to_ptr.hbm [resolvable:$true] %s571
          %574 = dma.vmem_to_hbm [thread:$0]  %s570, 128, %s572, %s556
        $region40: #{tpu_custom_call.1} parent=27 // pred_fallthru
          _
      $region28: #{tpu_custom_call.1} parent=5 // pred_fallthru
        _
      %p575 = scmp.le.s32.totalorder 2, %s15
      // Predicated region
      $region41: #{tpu_custom_call.1} parent=5 // pred_check
        %p576 = pneg %p575
      $region42: #{tpu_custom_call.1} parent=5 // pred_check_branch
        %578 = sbr.rel (%p576) target = $region44
      $region43: #{tpu_custom_call.1} parent=5 // pred_region
        %s579 = ssub.s32 %s15, 2
        // Predicated region
        $region45: #{tpu_custom_call.1} parent=43 // pred_check
          %p580 = pneg %p91
        $region46: #{tpu_custom_call.1} parent=43 // pred_check_branch
          %582 = sbr.rel (%p580) target = $region48
        $region47: #{tpu_custom_call.1} parent=43 // pred_region
          %s583 = sand.u32 %s76, 1
          %s584 = scalar_lea.sflag [#allocation4], %s583
          %s585 = sand.u32 %s76, 1
          %s586 = smul.addr %s585, 8
          %s587 = scalar_lea.vmem [#allocation7], %s586
          %589 = dma.done %s584, 128
        $region48: #{tpu_custom_call.1} parent=43 // pred_fallthru
          _
      $region44: #{tpu_custom_call.1} parent=5 // pred_fallthru
        _
    $region6: #{tpu_custom_call.1} parent=1 // loop_footer
      %s19 = sadd.s32 1, %s15
    $region7: #{tpu_custom_call.1} parent=1 // loop_footer_branch
      %14 = sbr.rel target = $region3
    $region8: #{tpu_custom_call.1} parent=1 // loop_exit
      _
    %590 = vsyncpa [#allocation3], 1
    %s591 = scalar_lea.sflag [#allocation3], 1
    %592 = vsyncpa %s591, 1
    %593 = vsyncpa [#allocation6], 1
    %594 = vsyncpa [#allocation4], 1
    %s595 = scalar_lea.sflag [#allocation4], 1
    %596 = vsyncpa %s595, 1

// kernel: tpu_custom_call.1
$region0: #{tpu_custom_call.1}
  #allocation0 [shape = 'u32[]', space=smem, size = 0x4, offset = 0x4, fixed_abs, tag = 'smem constant byte address 0x4 - core index']
  #allocation1 [shape = 'u32[72,128]{1,0:T(1,128)}', space=vmem, size = 0x9000, scoped, tag = 'internal scratch']
  %s0 = inlined_call_operand.hbm [shape: f32[2,4,256], index: 0, kind: input, shape index: {}]
  %s1 = inlined_call_operand.hbm [shape: f32[512,256], index: 1, kind: input, shape index: {}]
  %s2 = inlined_call_operand.hbm [shape: f32[2,4,256], index: 2, kind: output, shape index: {}]
  %s3 = sld [smem:[#allocation0]]
  $region49: #{tpu_custom_call.1} parent=0
    _
  %s5 = ssub.s32 1, %s3
  %s6 = scalar_select 0, %s5, %s3
  $region1: #{tpu_custom_call.1} parent=0
    #allocation2 [shape = 'u8[8192]{0}', space=vmem, size = 0x2000, scoped, tag = 'input window, operand 0']
    #allocation3 [shape = 's32[2]{0}', space=sflag, size = 0x8, scoped, tag = 'scoped memory for tpu_custom_call.1']
    #allocation4 [shape = 's32[2]{0}', space=sflag, size = 0x8, scoped, tag = 'scoped memory for tpu_custom_call.1']
    #allocation5 [shape = 'u8[524288]{0}', space=vmem, size = 0x80000, scoped, tag = 'input window, operand 1, single buffered']
    #allocation6 [shape = 's32[1]{0}', space=sflag, size = 0x4, scoped, tag = 'scoped memory for tpu_custom_call.1']
    #allocation7 [shape = 'u8[8192]{0}', space=vmem, size = 0x2000, scoped, tag = 'output window, operand 0']
    %7 = vsyncpa [#allocation3], 0
    %s8 = scalar_lea.sflag [#allocation3], 1
    %9 = vsyncpa %s8, 0
    %10 = vsyncpa [#allocation6], 0
    %11 = vsyncpa [#allocation4], 0
    %s12 = scalar_lea.sflag [#allocation4], 1
    %13 = vsyncpa %s12, 0
    loop: start=0, step=1, limit=4
    $region2: #{tpu_custom_call.1} parent=1 // loop_pre_header
      _
    $region3: #{tpu_custom_call.1} parent=1 // loop_header
      %s15 = sphi 0, %s19
      %p16 = scmp.ge.s32.totalorder %s15, 4
      %s25 = sphi 0, %s27
      %s28 = sphi 0, %s25
      %s29 = sphi 0, %s28
      %s45 = sphi 0, %s29
      %s49 = sphi 0, %s49
      %s51 = sphi 0, %s49
      %s52 = sphi 0, %s51
      %s66 = sphi 0, %s52
      %s72 = sphi 0, %s74
      %s75 = sphi 0, %s72
      %s76 = sphi 0, %s75
      %s92 = sphi 0, %s76
    $region4: #{tpu_custom_call.1} parent=1 // loop_header_branch
      %18 = sbr.rel (%p16) target = $region8
    $region5: #{tpu_custom_call.1} parent=1 // loop_body
      %s20 = ssub.s32 %s15, 1
      %s21 = ssub.s32 %s15, 2
      %s22 = sadd.s32 %s15, 1
      %s23 = ssub.s32 %s15, %s22
      %p24 = scmp.eq.s32.totalorder %s23, 0
      %s26 = sadd.s32 %s25, 1
      %s27 = scalar_select %p24, %s25, %s26
      %p30 = pneg %p24
      %p31 = scmp.eq.s32.totalorder %s15, 1
      %p32 = por %p30, %p31
      %p33 = scmp.ne.s32.totalorder %s25, %s28
      %p34 = scmp.eq.s32.totalorder %s15, 0
      %p35 = por %p33, %p34
      %p36 = scmp.ne.s32.totalorder %s25, %s28
      %p37 = scmp.eq.s32.totalorder %s20, 1
      %p38 = por %p36, %p37
      %p39 = scmp.ne.s32.totalorder %s28, %s29
      %p40 = scmp.eq.s32.totalorder %s20, 0
      %p41 = por %p39, %p40
      %p42 = scmp.ne.s32.totalorder %s28, %s29
      %p43 = scmp.eq.s32.totalorder %s21, 1
      %p44 = por %p42, %p43
      %p46 = scmp.ne.s32.totalorder %s29, %s45
      %p47 = scmp.eq.s32.totalorder %s21, 0
      %p48 = por %p46, %p47
      %s50 = sadd.s32 %s49, 1
      %p53 = scmp.eq.s32.totalorder %s15, 1
      %p54 = scmp.ne.s32.totalorder %s49, %s51
      %p55 = scmp.eq.s32.totalorder %s15, 0
      %p56 = por %p54, %p55
      %p57 = scmp.ne.s32.totalorder %s49, %s51
      %p58 = scmp.eq.s32.totalorder %s20, 1
      %p59 = por %p57, %p58
      %p60 = scmp.ne.s32.totalorder %s51, %s52
      %p61 = scmp.eq.s32.totalorder %s20, 0
      %p62 = por %p60, %p61
      %p63 = scmp.ne.s32.totalorder %s51, %s52
      %p64 = scmp.eq.s32.totalorder %s21, 1
      %p65 = por %p63, %p64
      %p67 = scmp.ne.s32.totalorder %s52, %s66
      %p68 = scmp.eq.s32.totalorder %s21, 0
      %p69 = por %p67, %p68
      %s70 = ssub.s32 %s15, %s22
      %p71 = scmp.eq.s32.totalorder %s70, 0
      %s73 = sadd.s32 %s72, 1
      %s74 = scalar_select %p71, %s72, %s73
      %p77 = pneg %p71
      %p78 = scmp.eq.s32.totalorder %s15, 1
      %p79 = por %p77, %p78
      %p80 = scmp.ne.s32.totalorder %s72, %s75
      %p81 = scmp.eq.s32.totalorder %s15, 0
      %p82 = por %p80, %p81
      %p83 = scmp.ne.s32.totalorder %s72, %s75
      %p84 = scmp.eq.s32.totalorder %s20, 1
      %p85 = por %p83, %p84
      %p86 = scmp.ne.s32.totalorder %s75, %s76
      %p87 = scmp.eq.s32.totalorder %s20, 0
      %p88 = por %p86, %p87
      %p89 = scmp.ne.s32.totalorder %s75, %s76
      %p90 = scmp.eq.s32.totalorder %s21, 1
      %p91 = por %p89, %p90
      %p93 = scmp.ne.s32.totalorder %s76, %s92
      %p94 = scmp.eq.s32.totalorder %s21, 0
      %p95 = por %p93, %p94
      %p96 = scmp.le.s32.totalorder 1, %s15
      %p97 = scmp.lt.s32.totalorder %s15, 3
      %p98 = pnand %p96, %p97
      %p99 = pneg %p98
      // Predicated region
      $region9: #{tpu_custom_call.1} parent=5 // pred_check
        _
      $region10: #{tpu_custom_call.1} parent=5 // pred_check_branch
        %101 = sbr.rel (%p98) target = $region12
      $region11: #{tpu_custom_call.1} parent=5 // pred_region
        %s102 = ssub.s32 %s15, 1
        // Predicated region
        $region13: #{tpu_custom_call.1} parent=11 // pred_check
          %p103 = pneg %p62
        $region14: #{tpu_custom_call.1} parent=11 // pred_check_branch
          %105 = sbr.rel (%p103) target = $region16
        $region15: #{tpu_custom_call.1} parent=11 // pred_region
          %107 = vsyncadd [#allocation6], 0
          %s108 = sshll.u32 %s1, 4
          %s109 = int_to_ptr.hbm [resolvable:$true] %s108
          %s110 = sshll.u32 [#allocation5], 4
          %s111 = int_to_ptr.vmem [resolvable:$true] %s110
          %116 = dma.hbm_to_vmem [thread:$0]  %s109, 16384, %s111, [#allocation6], 256, 256, 16
        $region16: #{tpu_custom_call.1} parent=11 // pred_fallthru
          _
      $region12: #{tpu_custom_call.1} parent=5 // pred_fallthru
        _
      %p117 = scmp.lt.s32.totalorder %s15, 2
      // Predicated region
      $region17: #{tpu_custom_call.1} parent=5 // pred_check
        %p118 = pneg %p117
      $region18: #{tpu_custom_call.1} parent=5 // pred_check_branch
        %120 = sbr.rel (%p118) target = $region20
      $region19: #{tpu_custom_call.1} parent=5 // pred_region
        // Predicated region
        $region21: #{tpu_custom_call.1} parent=19 // pred_check
          %p121 = pneg %p35
        $region22: #{tpu_custom_call.1} parent=19 // pred_check_branch
          %123 = sbr.rel (%p121) target = $region24
        $region23: #{tpu_custom_call.1} parent=19 // pred_region
          %s124 = sand.u32 %s25, 1
          %s125 = scalar_lea.sflag [#allocation3], %s124
          %s126 = sand.u32 %s25, 1
          %s127 = smul.addr %s126, 8
          %s128 = scalar_lea.vmem [#allocation2], %s127
          %130 = vsyncadd %s125, 0
          %s131 = smul.addr %s15, 2
          %s132 = smul.addr %s131, 4
          %s133 = scalar_lea.hbm %s0, %s132
          %s135 = sshll.u32 %s133, 4
          %s136 = int_to_ptr.hbm [resolvable:$true] %s135
          %s137 = sshll.u32 %s128, 4
          %s138 = int_to_ptr.vmem [resolvable:$true] %s137
          %140 = dma.hbm_to_vmem [thread:$0]  %s136, 128, %s138, %s125
        $region24: #{tpu_custom_call.1} parent=19 // pred_fallthru
          _
      $region20: #{tpu_custom_call.1} parent=5 // pred_fallthru
        _
      %p141 = scmp.le.s32.totalorder 1, %s15
      %p142 = scmp.lt.s32.totalorder %s15, 3
      %p143 = pnand %p141, %p142
      %p144 = pneg %p143
      // Predicated region
      $region25: #{tpu_custom_call.1} parent=5 // pred_check
        _
      $region26: #{tpu_custom_call.1} parent=5 // pred_check_branch
        %146 = sbr.rel (%p143) target = $region28
      $region27: #{tpu_custom_call.1} parent=5 // pred_region
        %s147 = ssub.s32 %s15, 1
        %s148 = sand.u32 %s28, 1
        %s149 = scalar_lea.sflag [#allocation3], %s148
        %s150 = sand.u32 %s28, 1
        %s151 = smul.addr %s150, 8
        %s152 = scalar_lea.vmem [#allocation2], %s151
        // Predicated region
        $region29: #{tpu_custom_call.1} parent=27 // pred_check
          %p153 = pneg %p41
        $region30: #{tpu_custom_call.1} parent=27 // pred_check_branch
          %155 = sbr.rel (%p153) target = $region32
        $region31: #{tpu_custom_call.1} parent=27 // pred_region
          %157 = dma.done %s149, 128
        $region32: #{tpu_custom_call.1} parent=27 // pred_fallthru
          _
        // Predicated region
        $region33: #{tpu_custom_call.1} parent=27 // pred_check
          %p158 = pneg %p62
        $region34: #{tpu_custom_call.1} parent=27 // pred_check_branch
          %160 = sbr.rel (%p158) target = $region36
        $region35: #{tpu_custom_call.1} parent=27 // pred_region
          %162 = dma.done [#allocation6], 16384
        $region36: #{tpu_custom_call.1} parent=27 // pred_fallthru
          _
        %s163 = sand.u32 %s28, 1
        %s164 = scalar_lea.sflag [#allocation3], %s163
        %s165 = sand.u32 %s28, 1
        %s166 = smul.addr %s165, 8
        %s167 = scalar_lea.vmem [#allocation2], %s166
        %p168 = pneg %p41
        %p169 = pneg %p38
        %p170 = pneg %p62
        %p171 = pneg %p59
        %p172 = pneg %p88
        %p173 = pneg %p85
        %s174 = sand.u32 %s75, 1
        %s175 = scalar_lea.sflag [#allocation4], %s174
        %s176 = sand.u32 %s75, 1
        %s177 = smul.addr %s176, 8
        %s178 = scalar_lea.vmem [#allocation7], %s177
        %v179 = vld [vmem:[%s152] sm:$0xff]
        %181 = vst [vmem:[#allocation1] ss:$2 sm:$0xff] %v179
        %v182 = vld.sshfl [vmem:[#allocation1] sm:$0xff pattern:$0x75316420]
        %v183 = vld.sshfl [vmem:[#allocation1 + $0x8] sm:$0xff pattern:$0x75316420]
        %vm186 = vcmask 1043456
        %v187 = vsel %vm186, %v182, -inf
        %v188 = vrot.slane %v187, 4
        %v189 = vmax.f32 %v187, %v188
        %v190 = vrot.slane %v189, 2
        %v191 = vmax.f32 %v189, %v190
        %v192 = vrot.slane %v191, 1
        %v193 = vmax.f32 %v191, %v192
        %v194 = vsel %vm186, %v183, -inf
        %v195 = vrot.slane %v194, 4
        %v196 = vmax.f32 %v194, %v195
        %v197 = vrot.slane %v196, 2
        %v198 = vmax.f32 %v196, %v197
        %v199 = vrot.slane %v198, 1
        %v200 = vmax.f32 %v198, %v199
        %201 = vst [vmem:[#allocation1] ss:$2 sm:$0xff] %v179
        %v202 = vld.sshfl [vmem:[#allocation1] sm:$0xff pattern:$0x75316420]
        %v203 = vld.sshfl [vmem:[#allocation1 + $0x8] sm:$0xff pattern:$0x75316420]
        %v206 = vsel %vm186, %v202, 0.0
        %v207 = vrot.slane %v206, 4
        %v208 = vadd.f32 %v206, %v207
        %v209 = vrot.slane %v208, 2
        %v210 = vadd.f32 %v208, %v209
        %v211 = vrot.slane %v210, 1
        %v212 = vadd.f32 %v210, %v211
        %v213 = vsel %vm186, %v203, 0.0
        %v214 = vrot.slane %v213, 4
        %v215 = vadd.f32 %v213, %v214
        %v216 = vrot.slane %v215, 2
        %v217 = vadd.f32 %v215, %v216
        %v218 = vrot.slane %v217, 1
        %v219 = vadd.f32 %v217, %v218
        %v220 = vld [vmem:[#allocation5] sm:$0xff]
        %v221 = vld [vmem:[#allocation5 + $0x8] sm:$0xff]
        %v222 = vld [vmem:[#allocation5 + $0x10] sm:$0xff]
        %v223 = vld [vmem:[#allocation5 + $0x18] sm:$0xff]
        %v224 = vld [vmem:[#allocation5 + $0x20] sm:$0xff]
        %v225 = vld [vmem:[#allocation5 + $0x28] sm:$0xff]
        %v226 = vld [vmem:[#allocation5 + $0x30] sm:$0xff]
        %v227 = vld [vmem:[#allocation5 + $0x38] sm:$0xff]
        %v228 = vld [vmem:[#allocation5 + $0x40] sm:$0xff]
        %v229 = vld [vmem:[#allocation5 + $0x48] sm:$0xff]
        %v230 = vld [vmem:[#allocation5 + $0x50] sm:$0xff]
        %v231 = vld [vmem:[#allocation5 + $0x58] sm:$0xff]
        %v232 = vld [vmem:[#allocation5 + $0x60] sm:$0xff]
        %v233 = vld [vmem:[#allocation5 + $0x68] sm:$0xff]
        %v234 = vld [vmem:[#allocation5 + $0x70] sm:$0xff]
        %v235 = vld [vmem:[#allocation5 + $0x78] sm:$0xff]
        %v236 = vld [vmem:[#allocation5 + $0x80] sm:$0xff]
        %v237 = vld [vmem:[#allocation5 + $0x88] sm:$0xff]
        %v238 = vld [vmem:[#allocation5 + $0x90] sm:$0xff]
        %v239 = vld [vmem:[#allocation5 + $0x98] sm:$0xff]
        %v240 = vld [vmem:[#allocation5 + $0xa0] sm:$0xff]
        %v241 = vld [vmem:[#allocation5 + $0xa8] sm:$0xff]
        %v242 = vld [vmem:[#allocation5 + $0xb0] sm:$0xff]
        %v243 = vld [vmem:[#allocation5 + $0xb8] sm:$0xff]
        %v244 = vld [vmem:[#allocation5 + $0xc0] sm:$0xff]
        %v245 = vld [vmem:[#allocation5 + $0xc8] sm:$0xff]
        %v246 = vld [vmem:[#allocation5 + $0xd0] sm:$0xff]
        %v247 = vld [vmem:[#allocation5 + $0xd8] sm:$0xff]
        %v248 = vld [vmem:[#allocation5 + $0xe0] sm:$0xff]
        %v249 = vld [vmem:[#allocation5 + $0xe8] sm:$0xff]
        %v250 = vld [vmem:[#allocation5 + $0xf0] sm:$0xff]
        %v251 = vld [vmem:[#allocation5 + $0xf8] sm:$0xff]
        %v252 = vld [vmem:[#allocation5 + $0x100] sm:$0xff]
        %v253 = vld [vmem:[#allocation5 + $0x108] sm:$0xff]
        %v254 = vld [vmem:[#allocation5 + $0x110] sm:$0xff]
        %v255 = vld [vmem:[#allocation5 + $0x118] sm:$0xff]
        %v256 = vld [vmem:[#allocation5 + $0x120] sm:$0xff]
        %v257 = vld [vmem:[#allocation5 + $0x128] sm:$0xff]
        %v258 = vld [vmem:[#allocation5 + $0x130] sm:$0xff]
        %v259 = vld [vmem:[#allocation5 + $0x138] sm:$0xff]
        %v260 = vld [vmem:[#allocation5 + $0x140] sm:$0xff]
        %v261 = vld [vmem:[#allocation5 + $0x148] sm:$0xff]
        %v262 = vld [vmem:[#allocation5 + $0x150] sm:$0xff]
        %v263 = vld [vmem:[#allocation5 + $0x158] sm:$0xff]
        %v264 = vld [vmem:[#allocation5 + $0x160] sm:$0xff]
        %v265 = vld [vmem:[#allocation5 + $0x168] sm:$0xff]
        %v266 = vld [vmem:[#allocation5 + $0x170] sm:$0xff]
        %v267 = vld [vmem:[#allocation5 + $0x178] sm:$0xff]
        %v268 = vld [vmem:[#allocation5 + $0x180] sm:$0xff]
        %v269 = vld [vmem:[#allocation5 + $0x188] sm:$0xff]
        %v270 = vld [vmem:[#allocation5 + $0x190] sm:$0xff]
        %v271 = vld [vmem:[#allocation5 + $0x198] sm:$0xff]
        %v272 = vld [vmem:[#allocation5 + $0x1a0] sm:$0xff]
        %v273 = vld [vmem:[#allocation5 + $0x1a8] sm:$0xff]
        %v274 = vld [vmem:[#allocation5 + $0x1b0] sm:$0xff]
        %v275 = vld [vmem:[#allocation5 + $0x1b8] sm:$0xff]
        %v276 = vld [vmem:[#allocation5 + $0x1c0] sm:$0xff]
        %v277 = vld [vmem:[#allocation5 + $0x1c8] sm:$0xff]
        %v278 = vld [vmem:[#allocation5 + $0x1d0] sm:$0xff]
        %v279 = vld [vmem:[#allocation5 + $0x1d8] sm:$0xff]
        %v280 = vld [vmem:[#allocation5 + $0x1e0] sm:$0xff]
        %v281 = vld [vmem:[#allocation5 + $0x1e8] sm:$0xff]
        %v282 = vld [vmem:[#allocation5 + $0x1f0] sm:$0xff]
        %v283 = vld [vmem:[#allocation5 + $0x1f8] sm:$0xff]
        %v284 = vld [vmem:[#allocation5 + $0x200] sm:$0xff]
        %v285 = vld [vmem:[#allocation5 + $0x208] sm:$0xff]
        %v286 = vld [vmem:[#allocation5 + $0x210] sm:$0xff]
        %v287 = vld [vmem:[#allocation5 + $0x218] sm:$0xff]
        %v288 = vld [vmem:[#allocation5 + $0x220] sm:$0xff]
        %v289 = vld [vmem:[#allocation5 + $0x228] sm:$0xff]
        %v290 = vld [vmem:[#allocation5 + $0x230] sm:$0xff]
        %v291 = vld [vmem:[#allocation5 + $0x238] sm:$0xff]
        %v292 = vld [vmem:[#allocation5 + $0x240] sm:$0xff]
        %v293 = vld [vmem:[#allocation5 + $0x248] sm:$0xff]
        %v294 = vld [vmem:[#allocation5 + $0x250] sm:$0xff]
        %v295 = vld [vmem:[#allocation5 + $0x258] sm:$0xff]
        %v296 = vld [vmem:[#allocation5 + $0x260] sm:$0xff]
        %v297 = vld [vmem:[#allocation5 + $0x268] sm:$0xff]
        %v298 = vld [vmem:[#allocation5 + $0x270] sm:$0xff]
        %v299 = vld [vmem:[#allocation5 + $0x278] sm:$0xff]
        %v300 = vld [vmem:[#allocation5 + $0x280] sm:$0xff]
        %v301 = vld [vmem:[#allocation5 + $0x288] sm:$0xff]
        %v302 = vld [vmem:[#allocation5 + $0x290] sm:$0xff]
        %v303 = vld [vmem:[#allocation5 + $0x298] sm:$0xff]
        %v304 = vld [vmem:[#allocation5 + $0x2a0] sm:$0xff]
        %v305 = vld [vmem:[#allocation5 + $0x2a8] sm:$0xff]
        %v306 = vld [vmem:[#allocation5 + $0x2b0] sm:$0xff]
        %v307 = vld [vmem:[#allocation5 + $0x2b8] sm:$0xff]
        %v308 = vld [vmem:[#allocation5 + $0x2c0] sm:$0xff]
        %v309 = vld [vmem:[#allocation5 + $0x2c8] sm:$0xff]
        %v310 = vld [vmem:[#allocation5 + $0x2d0] sm:$0xff]
        %v311 = vld [vmem:[#allocation5 + $0x2d8] sm:$0xff]
        %v312 = vld [vmem:[#allocation5 + $0x2e0] sm:$0xff]
        %v313 = vld [vmem:[#allocation5 + $0x2e8] sm:$0xff]
        %v314 = vld [vmem:[#allocation5 + $0x2f0] sm:$0xff]
        %v315 = vld [vmem:[#allocation5 + $0x2f8] sm:$0xff]
        %v316 = vld [vmem:[#allocation5 + $0x300] sm:$0xff]
        %v317 = vld [vmem:[#allocation5 + $0x308] sm:$0xff]
        %v318 = vld [vmem:[#allocation5 + $0x310] sm:$0xff]
        %v319 = vld [vmem:[#allocation5 + $0x318] sm:$0xff]
        %v320 = vld [vmem:[#allocation5 + $0x320] sm:$0xff]
        %v321 = vld [vmem:[#allocation5 + $0x328] sm:$0xff]
        %v322 = vld [vmem:[#allocation5 + $0x330] sm:$0xff]
        %v323 = vld [vmem:[#allocation5 + $0x338] sm:$0xff]
        %v324 = vld [vmem:[#allocation5 + $0x340] sm:$0xff]
        %v325 = vld [vmem:[#allocation5 + $0x348] sm:$0xff]
        %v326 = vld [vmem:[#allocation5 + $0x350] sm:$0xff]
        %v327 = vld [vmem:[#allocation5 + $0x358] sm:$0xff]
        %v328 = vld [vmem:[#allocation5 + $0x360] sm:$0xff]
        %v329 = vld [vmem:[#allocation5 + $0x368] sm:$0xff]
        %v330 = vld [vmem:[#allocation5 + $0x370] sm:$0xff]
        %v331 = vld [vmem:[#allocation5 + $0x378] sm:$0xff]
        %v332 = vld [vmem:[#allocation5 + $0x380] sm:$0xff]
        %v333 = vld [vmem:[#allocation5 + $0x388] sm:$0xff]
        %v334 = vld [vmem:[#allocation5 + $0x390] sm:$0xff]
        %v335 = vld [vmem:[#allocation5 + $0x398] sm:$0xff]
        %v336 = vld [vmem:[#allocation5 + $0x3a0] sm:$0xff]
        %v337 = vld [vmem:[#allocation5 + $0x3a8] sm:$0xff]
        %v338 = vld [vmem:[#allocation5 + $0x3b0] sm:$0xff]
        %v339 = vld [vmem:[#allocation5 + $0x3b8] sm:$0xff]
        %v340 = vld [vmem:[#allocation5 + $0x3c0] sm:$0xff]
        %v341 = vld [vmem:[#allocation5 + $0x3c8] sm:$0xff]
        %v342 = vld [vmem:[#allocation5 + $0x3d0] sm:$0xff]
        %v343 = vld [vmem:[#allocation5 + $0x3d8] sm:$0xff]
        %v344 = vld [vmem:[#allocation5 + $0x3e0] sm:$0xff]
        %v345 = vld [vmem:[#allocation5 + $0x3e8] sm:$0xff]
        %v346 = vld [vmem:[#allocation5 + $0x3f0] sm:$0xff]
        %v347 = vld [vmem:[#allocation5 + $0x3f8] sm:$0xff]
        %348 = vmatpush.msra.mxu0 %v250
        %349 = vmatpush.msra.mxu0 %v248
        %350 = vmatpush.msra.mxu0 %v246
        %351 = vmatpush.msra.mxu0 %v244
        %352 = vmatpush.msra.mxu0 %v242
        %353 = vmatpush.msra.mxu0 %v240
        %354 = vmatpush.msra.mxu0 %v238
        %355 = vmatpush.msra.mxu0 %v236
        %356 = vmatpush.msra.mxu0 %v234
        %357 = vmatpush.msra.mxu0 %v232
        %358 = vmatpush.msra.mxu0 %v230
        %359 = vmatpush.msra.mxu0 %v228
        %360 = vmatpush.msra.mxu0 %v226
        %361 = vmatpush.msra.mxu0 %v224
        %362 = vmatpush.msra.mxu0 %v222
        %363 = vmatpush.msra.mxu0 %v220
        %364 = vmatmul.f32.gmra.mxu0 %v193
        %v365 = vpop.f32.mrf.mxu0
        %v366 = vadd.f32 0.0, %v365
        %367 = vdwg.mxu0
        %368 = vmatpush.msra.mxu0 %v282
        %369 = vmatpush.msra.mxu0 %v280
        %370 = vmatpush.msra.mxu0 %v278
        %371 = vmatpush.msra.mxu0 %v276
        %372 = vmatpush.msra.mxu0 %v274
        %373 = vmatpush.msra.mxu0 %v272
        %374 = vmatpush.msra.mxu0 %v270
        %375 = vmatpush.msra.mxu0 %v268
        %376 = vmatpush.msra.mxu0 %v266
        %377 = vmatpush.msra.mxu0 %v264
        %378 = vmatpush.msra.mxu0 %v262
        %379 = vmatpush.msra.mxu0 %v260
        %380 = vmatpush.msra.mxu0 %v258
        %381 = vmatpush.msra.mxu0 %v256
        %382 = vmatpush.msra.mxu0 %v254
        %383 = vmatpush.msra.mxu0 %v252
        %384 = vmatmul.f32.gmra.mxu0 %v200
        %v385 = vpop.f32.mrf.mxu0
        %v386 = vadd.f32 %v366, %v385
        %387 = vdwg.mxu0
        %388 = vmatpush.msra.mxu0 %v314
        %389 = vmatpush.msra.mxu0 %v312
        %390 = vmatpush.msra.mxu0 %v310
        %391 = vmatpush.msra.mxu0 %v308
        %392 = vmatpush.msra.mxu0 %v306
        %393 = vmatpush.msra.mxu0 %v304
        %394 = vmatpush.msra.mxu0 %v302
        %395 = vmatpush.msra.mxu0 %v300
        %396 = vmatpush.msra.mxu0 %v298
        %397 = vmatpush.msra.mxu0 %v296
        %398 = vmatpush.msra.mxu0 %v294
        %399 = vmatpush.msra.mxu0 %v292
        %400 = vmatpush.msra.mxu0 %v290
        %401 = vmatpush.msra.mxu0 %v288
        %402 = vmatpush.msra.mxu0 %v286
        %403 = vmatpush.msra.mxu0 %v284
        %404 = vmatmul.f32.gmra.mxu0 %v212
        %v405 = vpop.f32.mrf.mxu0
        %v406 = vadd.f32 %v386, %v405
        %407 = vdwg.mxu0
        %408 = vmatpush.msra.mxu0 %v346
        %409 = vmatpush.msra.mxu0 %v344
        %410 = vmatpush.msra.mxu0 %v342
        %411 = vmatpush.msra.mxu0 %v340
        %412 = vmatpush.msra.mxu0 %v338
        %413 = vmatpush.msra.mxu0 %v336
        %414 = vmatpush.msra.mxu0 %v334
        %415 = vmatpush.msra.mxu0 %v332
        %416 = vmatpush.msra.mxu0 %v330
        %417 = vmatpush.msra.mxu0 %v328
        %418 = vmatpush.msra.mxu0 %v326
        %419 = vmatpush.msra.mxu0 %v324
        %420 = vmatpush.msra.mxu0 %v322
        %421 = vmatpush.msra.mxu0 %v320
        %422 = vmatpush.msra.mxu0 %v318
        %423 = vmatpush.msra.mxu0 %v316
        %424 = vmatmul.f32.gmra.mxu0 %v219
        %v425 = vpop.f32.mrf.mxu0
        %v426 = vadd.f32 %v406, %v425
        %427 = vdwg.mxu0
        %428 = vmatpush.msra.mxu0 %v251
        %429 = vmatpush.msra.mxu0 %v249
        %430 = vmatpush.msra.mxu0 %v247
        %431 = vmatpush.msra.mxu0 %v245
        %432 = vmatpush.msra.mxu0 %v243
        %433 = vmatpush.msra.mxu0 %v241
        %434 = vmatpush.msra.mxu0 %v239
        %435 = vmatpush.msra.mxu0 %v237
        %436 = vmatpush.msra.mxu0 %v235
        %437 = vmatpush.msra.mxu0 %v233
        %438 = vmatpush.msra.mxu0 %v231
        %439 = vmatpush.msra.mxu0 %v229
        %440 = vmatpush.msra.mxu0 %v227
        %441 = vmatpush.msra.mxu0 %v225
        %442 = vmatpush.msra.mxu0 %v223
        %443 = vmatpush.msra.mxu0 %v221
        %444 = vmatmul.f32.gmra.mxu0 %v193
        %v445 = vpop.f32.mrf.mxu0
        %v446 = vadd.f32 0.0, %v445
        %447 = vdwg.mxu0
        %448 = vmatpush.msra.mxu0 %v283
        %449 = vmatpush.msra.mxu0 %v281
        %450 = vmatpush.msra.mxu0 %v279
        %451 = vmatpush.msra.mxu0 %v277
        %452 = vmatpush.msra.mxu0 %v275
        %453 = vmatpush.msra.mxu0 %v273
        %454 = vmatpush.msra.mxu0 %v271
        %455 = vmatpush.msra.mxu0 %v269
        %456 = vmatpush.msra.mxu0 %v267
        %457 = vmatpush.msra.mxu0 %v265
        %458 = vmatpush.msra.mxu0 %v263
        %459 = vmatpush.msra.mxu0 %v261
        %460 = vmatpush.msra.mxu0 %v259
        %461 = vmatpush.msra.mxu0 %v257
        %462 = vmatpush.msra.mxu0 %v255
        %463 = vmatpush.msra.mxu0 %v253
        %464 = vmatmul.f32.gmra.mxu0 %v200
        %v465 = vpop.f32.mrf.mxu0
        %v466 = vadd.f32 %v446, %v465
        %467 = vdwg.mxu0
        %468 = vmatpush.msra.mxu0 %v315
        %469 = vmatpush.msra.mxu0 %v313
        %470 = vmatpush.msra.mxu0 %v311
        %471 = vmatpush.msra.mxu0 %v309
        %472 = vmatpush.msra.mxu0 %v307
        %473 = vmatpush.msra.mxu0 %v305
        %474 = vmatpush.msra.mxu0 %v303
        %475 = vmatpush.msra.mxu0 %v301
        %476 = vmatpush.msra.mxu0 %v299
        %477 = vmatpush.msra.mxu0 %v297
        %478 = vmatpush.msra.mxu0 %v295
        %479 = vmatpush.msra.mxu0 %v293
        %480 = vmatpush.msra.mxu0 %v291
        %481 = vmatpush.msra.mxu0 %v289
        %482 = vmatpush.msra.mxu0 %v287
        %483 = vmatpush.msra.mxu0 %v285
        %484 = vmatmul.f32.gmra.mxu0 %v212
        %v485 = vpop.f32.mrf.mxu0
        %v486 = vadd.f32 %v466, %v485
        %487 = vdwg.mxu0
        %488 = vmatpush.msra.mxu0 %v347
        %489 = vmatpush.msra.mxu0 %v345
        %490 = vmatpush.msra.mxu0 %v343
        %491 = vmatpush.msra.mxu0 %v341
        %492 = vmatpush.msra.mxu0 %v339
        %493 = vmatpush.msra.mxu0 %v337
        %494 = vmatpush.msra.mxu0 %v335
        %495 = vmatpush.msra.mxu0 %v333
        %496 = vmatpush.msra.mxu0 %v331
        %497 = vmatpush.msra.mxu0 %v329
        %498 = vmatpush.msra.mxu0 %v327
        %499 = vmatpush.msra.mxu0 %v325
        %500 = vmatpush.msra.mxu0 %v323
        %501 = vmatpush.msra.mxu0 %v321
        %502 = vmatpush.msra.mxu0 %v319
        %503 = vmatpush.msra.mxu0 %v317
        %504 = vmatmul.f32.gmra.mxu0 %v219
        %v505 = vpop.f32.mrf.mxu0
        %v506 = vadd.f32 %v486, %v505
        %507 = vdwg.mxu0
        %v508 = vxor.u32 %v426, 2147483648
        %v509 = vxor.u32 %v506, 2147483648
        %v510 = vmul.f32 %v508, 1.442695
        %v511 = vpow.pop %v510
        %v512 = vmul.f32 %v509, 1.442695
        %v513 = vpow.pop %v512
        %v514 = vadd.f32 %v511, 1.0
        %v515 = vadd.f32 %v513, 1.0
        %v516 = vrcp.pop %v514
        %v517 = vmul.f32 %v514, %v516
        %v518 = vsub.f32 1.0, %v517
        %v519 = vmul.f32 %v516, %v518
        %v520 = vadd.f32 %v516, %v519
        %vm521 = vweird.f32 %v514
        %vm522 = vweird.f32 %v516
        %vm523 = vmor %vm521, %vm522
        %v524 = vsel %vm523, %v516, %v520
        %v525 = vand.u32 2147483647, %v514
        %vm526 = vcmp.eq.f32.partialorder %v525, 8.507059e+37
        %v527 = vand.u32 %v514, 2147483648
        %v528 = vor.u32 1.1754944e-38, %v527
        %v529 = vsel %vm526, %v528, %v524
        %v530 = vmul.f32 1.0, %v529
        %v531 = vrcp.pop %v515
        %v532 = vmul.f32 %v515, %v531
        %v533 = vsub.f32 1.0, %v532
        %v534 = vmul.f32 %v531, %v533
        %v535 = vadd.f32 %v531, %v534
        %vm536 = vweird.f32 %v515
        %vm537 = vweird.f32 %v531
        %vm538 = vmor %vm536, %vm537
        %v539 = vsel %vm538, %v531, %v535
        %v540 = vand.u32 2147483647, %v515
        %vm541 = vcmp.eq.f32.partialorder %v540, 8.507059e+37
        %v542 = vand.u32 %v515, 2147483648
        %v543 = vor.u32 1.1754944e-38, %v542
        %v544 = vsel %vm541, %v543, %v539
        %v545 = vmul.f32 1.0, %v544
        %v546 = vperm.slane %v530, 0
        %v547 = vperm.slane %v545, 0
        %v550 = vrot.slane %v547, 4
        %v551 = vsel %vm186, %v546, %v550
        %v553 = vmul.f32 %v179, %v551
        %554 = vst [vmem:[%s178] sm:$0xff] %v553
        %s555 = sand.u32 %s75, 1
        %s556 = scalar_lea.sflag [#allocation4], %s555
        %s557 = sand.u32 %s75, 1
        %s558 = smul.addr %s557, 8
        %s559 = scalar_lea.vmem [#allocation7], %s558
        // Predicated region
        $region37: #{tpu_custom_call.1} parent=27 // pred_check
          %p560 = pneg %p85
        $region38: #{tpu_custom_call.1} parent=27 // pred_check_branch
          %562 = sbr.rel (%p560) target = $region40
        $region39: #{tpu_custom_call.1} parent=27 // pred_region
          %564 = vsyncadd %s556, 0
          %s565 = smul.addr %s20, 2
          %s566 = smul.addr %s565, 4
          %s567 = scalar_lea.hbm %s2, %s566
          %s569 = sshll.u32 %s559, 4
          %s570 = int_to_ptr.vmem [resolvable:$true] %s569
          %s571 = sshll.u32 %s567, 4
          %s572 = int_to_ptr.hbm [resolvable:$true] %s571
          %574 = dma.vmem_to_hbm [thread:$0]  %s570, 128, %s572, %s556
        $region40: #{tpu_custom_call.1} parent=27 // pred_fallthru
          _
      $region28: #{tpu_custom_call.1} parent=5 // pred_fallthru
        _
      %p575 = scmp.le.s32.totalorder 2, %s15
      // Predicated region
      $region41: #{tpu_custom_call.1} parent=5 // pred_check
        %p576 = pneg %p575
      $region42: #{tpu_custom_call.1} parent=5 // pred_check_branch
        %578 = sbr.rel (%p576) target = $region44
      $region43: #{tpu_custom_call.1} parent=5 // pred_region
        %s579 = ssub.s32 %s15, 2
        // Predicated region
        $region45: #{tpu_custom_call.1} parent=43 // pred_check
          %p580 = pneg %p91
        $region46: #{tpu_custom_call.1} parent=43 // pred_check_branch
          %582 = sbr.rel (%p580) target = $region48
        $region47: #{tpu_custom_call.1} parent=43 // pred_region
          %s583 = sand.u32 %s76, 1
          %s584 = scalar_lea.sflag [#allocation4], %s583
          %s585 = sand.u32 %s76, 1
          %s586 = smul.addr %s585, 8
          %s587 = scalar_lea.vmem [#allocation7], %s586
          %589 = dma.done %s584, 128
        $region48: #{tpu_custom_call.1} parent=43 // pred_fallthru
          _
      $region44: #{tpu_custom_call.1} parent=5 // pred_fallthru
        _
    $region6: #{tpu_custom_call.1} parent=1 // loop_footer
      %s19 = sadd.s32 1, %s15
    $region7: #{tpu_custom_call.1} parent=1 // loop_footer_branch
      %14 = sbr.rel target = $region3
    $region8: #{tpu_custom_call.1} parent=1 // loop_exit
      _
    %590 = vsyncpa [#allocation3], 1
    %s591 = scalar_lea.sflag [#allocation3], 1
    %592 = vsyncpa %s591, 1
    %593 = vsyncpa [#allocation6], 1
    %594 = vsyncpa [#allocation4], 1
    %s595 = scalar_lea.sflag [#allocation4], 1
    %596 = vsyncpa %s595, 1

</llo_original>
